<compile_context>
chip_gen: v5e
topology: v5e:2x2
jax: 0.10.0
libtpu: 0.0.40
codegen_flags: <defaults>
</compile_context>

<pallas_src>
import jax
import jax.numpy as jnp
from jax.experimental import pallas as pl
from jax.experimental.pallas import tpu as pltpu


def _round_up(n, m):
    return ((n + m - 1) // m) * m


def _make_conv_kernel(kh, kw):
    """Build a Pallas kernel specialized to a static KH x KW filter."""

    def conv_kernel(x_ref, w_ref, b_ref, o_ref):
        # x_ref: VMEM [H_pad, W_pad]; w_ref: SMEM [KH, KW]; b_ref: SMEM [1]
        # o_ref: VMEM [H_pad, W_pad]  (valid region [:HO, :WO]; rest discarded)
        xv = x_ref[...]                       # single full-tile load
        hp, wp = xv.shape                     # static

        # Bias folded into the accumulator init (saves a full VPU pass + broadcast).
        acc = jnp.full((hp, wp), b_ref[0], dtype=jnp.float32)

        # Cross-correlation: tap (i, j) needs x[r+i, c+j] aligned at (r, c).
        # Realize each tap with XLU rotations (same convention as jnp.roll:
        # rolling by (n - k) % n brings element r+k to position r). Wrapped
        # garbage lands only at r >= HO or c >= WO, which the wrapper slices off.
        for i in range(kh):
            xr = pltpu.roll(xv, shift=(hp - i) % hp, axis=0) if i else xv
            for j in range(kw):
                tap = pltpu.roll(xr, shift=(wp - j) % wp, axis=1) if j else xr
                acc = acc + tap.astype(jnp.float32) * w_ref[i, j]

        o_ref[...] = acc                      # full-width, lane-dense store

    return conv_kernel


def conv2d_pallas(x, weight, bias):
    """2D cross-correlation of x [H, W] with weight [KH, KW], plus scalar bias."""
    H, W = x.shape
    KH, KW = weight.shape
    HO, WO = H - KH + 1, W - KW + 1

    # Pad to sublane/lane-aligned shape so loads/stores are unmasked and
    # all shifted taps stay full-width (lane-dense).
    H_pad = _round_up(max(H, 8), 8)
    W_pad = _round_up(max(W, 128), 128)
    x_pad = jnp.pad(x.astype(jnp.float32), ((0, H_pad - H), (0, W_pad - W)))

    kernel = _make_conv_kernel(KH, KW)

    out_pad = pl.pallas_call(
        kernel,
        out_shape=jax.ShapeDtypeStruct((H_pad, W_pad), jnp.float32),
        grid_spec=pltpu.PrefetchScalarGridSpec(
            num_scalar_prefetch=0,
            grid=(1,),
            in_specs=[
                # Full (padded) input tile resident in VMEM — tiny at these sizes.
                pl.BlockSpec((H_pad, W_pad), lambda i: (0, 0)),
                # Filter taps and bias as scalars in SMEM.
                pl.BlockSpec(memory_space=pltpu.MemorySpace.SMEM),
                pl.BlockSpec(memory_space=pltpu.MemorySpace.SMEM),
            ],
            out_specs=pl.BlockSpec((H_pad, W_pad), lambda i: (0, 0)),
        ),
        compiler_params=pltpu.CompilerParams(
            dimension_semantics=("arbitrary",),
            # Explicit, generous-but-safe limit: fits the v5e 16 MiB scoped default
            # and leaves ample headroom on v6e/v7x for this footprint (~128 KiB).
            vmem_limit_bytes=16 * 1024 * 1024,
        ),
    )(x_pad, weight.astype(jnp.float32), bias.astype(jnp.float32))

    # Slice back the valid window (drops the lane/sublane padding + wrap garbage).
    return out_pad[:HO, :WO]


def conv2d_ref(x, weight, bias):
    """Pure-JAX reference matching the torch loop exactly."""
    H, W = x.shape
    KH, KW = weight.shape
    HO, WO = H - KH + 1, W - KW + 1
    out = jnp.zeros((HO, WO), jnp.float32)
    for i in range(HO):
        for j in range(WO):
            out = out.at[i, j].set(jnp.sum(x[i:i + KH, j:j + KW] * weight))
    return out + bias[0]


if __name__ == "__main__":
    key = jax.random.PRNGKey(0)
    k_x, k_w = jax.random.split(key)

    # Small shapes consistent with the module: 2D input, kernel_size=(3, 3).
    H, W = 16, 16
    KH, KW = 3, 3

    x = jax.random.normal(k_x, (H, W), dtype=jnp.float32)
    # torch.rand(kernel_size) -> uniform [0, 1); deterministic synthetic init.
    weight = jax.random.uniform(k_w, (KH, KW), dtype=jnp.float32)
    bias = jnp.zeros((1,), dtype=jnp.float32)

    out = conv2d_pallas(x, weight, bias)
    out = jax.block_until_ready(out)

    ref = conv2d_ref(x, weight, bias)
    assert out.shape == (H - KH + 1, W - KW + 1), out.shape
    assert jnp.allclose(out, ref, atol=1e-5, rtol=1e-5), float(jnp.max(jnp.abs(out - ref)))

    print("KERNEL_OK")
</pallas_src>

<mosaic_0001>
module attributes {stable_mosaic.version = 11 : i64} {
  func.func @conv_kernel(%arg0: i32, %arg1: memref<16x128xf32, #tpu.memory_space<vmem>>, %arg2: memref<3x3xf32, #tpu.memory_space<smem>>, %arg3: memref<1xf32, #tpu.memory_space<smem>>, %arg4: memref<16x128xf32, #tpu.memory_space<vmem>>) attributes {dimension_semantics = [#tpu.dimension_semantics<arbitrary>], iteration_bounds = array<i64: 1>, scalar_prefetch = 0 : i64, scratch_operands = 0 : i64, tpu.core_type = #tpu.core_type<tc>, window_params = [{pipeline_mode = #tpu.pipeline_mode<synchronous>, transform_indices = @transform_0, window_bounds = array<i64: 16, 128>}, {transform_indices = @transform_1, window_bounds = array<i64: 3, 3>}, {transform_indices = @transform_2, window_bounds = array<i64: 1>}, {pipeline_mode = #tpu.pipeline_mode<synchronous>, transform_indices = @transform_3, window_bounds = array<i64: 16, 128>}]} {
    %c0 = arith.constant 0 : index
    %c0_0 = arith.constant 0 : index
    %0 = vector.load %arg1[%c0, %c0_0] : memref<16x128xf32, #tpu.memory_space<vmem>>, vector<16x128xf32>
    %c0_1 = arith.constant 0 : index
    %1 = memref.load %arg3[%c0_1] : memref<1xf32, #tpu.memory_space<smem>>
    %2 = vector.broadcast %1 : f32 to vector<16x128xf32>
    %c0_2 = arith.constant 0 : index
    %c0_3 = arith.constant 0 : index
    %3 = memref.load %arg2[%c0_2, %c0_3] : memref<3x3xf32, #tpu.memory_space<smem>>
    %4 = vector.broadcast %3 : f32 to vector<16x128xf32>
    %5 = arith.mulf %0, %4 : vector<16x128xf32>
    %6 = arith.addf %2, %5 : vector<16x128xf32>
    %c127_i32 = arith.constant 127 : i32
    %7 = tpu.dynamic_rotate %0 by %c127_i32 dim 1 : vector<16x128xf32>, i32 -> vector<16x128xf32>
    %c0_4 = arith.constant 0 : index
    %c1 = arith.constant 1 : index
    %8 = memref.load %arg2[%c0_4, %c1] : memref<3x3xf32, #tpu.memory_space<smem>>
    %9 = vector.broadcast %8 : f32 to vector<16x128xf32>
    %10 = arith.mulf %7, %9 : vector<16x128xf32>
    %11 = arith.addf %6, %10 : vector<16x128xf32>
    %c126_i32 = arith.constant 126 : i32
    %12 = tpu.dynamic_rotate %0 by %c126_i32 dim 1 : vector<16x128xf32>, i32 -> vector<16x128xf32>
    %c0_5 = arith.constant 0 : index
    %c2 = arith.constant 2 : index
    %13 = memref.load %arg2[%c0_5, %c2] : memref<3x3xf32, #tpu.memory_space<smem>>
    %14 = vector.broadcast %13 : f32 to vector<16x128xf32>
    %15 = arith.mulf %12, %14 : vector<16x128xf32>
    %16 = arith.addf %11, %15 : vector<16x128xf32>
    %c15_i32 = arith.constant 15 : i32
    %17 = tpu.dynamic_rotate %0 by %c15_i32 dim 0 : vector<16x128xf32>, i32 -> vector<16x128xf32>
    %c1_6 = arith.constant 1 : index
    %c0_7 = arith.constant 0 : index
    %18 = memref.load %arg2[%c1_6, %c0_7] : memref<3x3xf32, #tpu.memory_space<smem>>
    %19 = vector.broadcast %18 : f32 to vector<16x128xf32>
    %20 = arith.mulf %17, %19 : vector<16x128xf32>
    %21 = arith.addf %16, %20 : vector<16x128xf32>
    %c127_i32_8 = arith.constant 127 : i32
    %22 = tpu.dynamic_rotate %17 by %c127_i32_8 dim 1 : vector<16x128xf32>, i32 -> vector<16x128xf32>
    %c1_9 = arith.constant 1 : index
    %c1_10 = arith.constant 1 : index
    %23 = memref.load %arg2[%c1_9, %c1_10] : memref<3x3xf32, #tpu.memory_space<smem>>
    %24 = vector.broadcast %23 : f32 to vector<16x128xf32>
    %25 = arith.mulf %22, %24 : vector<16x128xf32>
    %26 = arith.addf %21, %25 : vector<16x128xf32>
    %c126_i32_11 = arith.constant 126 : i32
    %27 = tpu.dynamic_rotate %17 by %c126_i32_11 dim 1 : vector<16x128xf32>, i32 -> vector<16x128xf32>
    %c1_12 = arith.constant 1 : index
    %c2_13 = arith.constant 2 : index
    %28 = memref.load %arg2[%c1_12, %c2_13] : memref<3x3xf32, #tpu.memory_space<smem>>
    %29 = vector.broadcast %28 : f32 to vector<16x128xf32>
    %30 = arith.mulf %27, %29 : vector<16x128xf32>
    %31 = arith.addf %26, %30 : vector<16x128xf32>
    %c14_i32 = arith.constant 14 : i32
    %32 = tpu.dynamic_rotate %0 by %c14_i32 dim 0 : vector<16x128xf32>, i32 -> vector<16x128xf32>
    %c2_14 = arith.constant 2 : index
    %c0_15 = arith.constant 0 : index
    %33 = memref.load %arg2[%c2_14, %c0_15] : memref<3x3xf32, #tpu.memory_space<smem>>
    %34 = vector.broadcast %33 : f32 to vector<16x128xf32>
    %35 = arith.mulf %32, %34 : vector<16x128xf32>
    %36 = arith.addf %31, %35 : vector<16x128xf32>
    %c127_i32_16 = arith.constant 127 : i32
    %37 = tpu.dynamic_rotate %32 by %c127_i32_16 dim 1 : vector<16x128xf32>, i32 -> vector<16x128xf32>
    %c2_17 = arith.constant 2 : index
    %c1_18 = arith.constant 1 : index
    %38 = memref.load %arg2[%c2_17, %c1_18] : memref<3x3xf32, #tpu.memory_space<smem>>
    %39 = vector.broadcast %38 : f32 to vector<16x128xf32>
    %40 = arith.mulf %37, %39 : vector<16x128xf32>
    %41 = arith.addf %36, %40 : vector<16x128xf32>
    %c126_i32_19 = arith.constant 126 : i32
    %42 = tpu.dynamic_rotate %32 by %c126_i32_19 dim 1 : vector<16x128xf32>, i32 -> vector<16x128xf32>
    %c2_20 = arith.constant 2 : index
    %c2_21 = arith.constant 2 : index
    %43 = memref.load %arg2[%c2_20, %c2_21] : memref<3x3xf32, #tpu.memory_space<smem>>
    %44 = vector.broadcast %43 : f32 to vector<16x128xf32>
    %45 = arith.mulf %42, %44 : vector<16x128xf32>
    %46 = arith.addf %41, %45 : vector<16x128xf32>
    %c0_22 = arith.constant 0 : index
    %c0_23 = arith.constant 0 : index
    %47 = vector.load %arg4[%c0_22, %c0_23] : memref<16x128xf32, #tpu.memory_space<vmem>>, vector<16x128xf32>
    tpu.vector_store %arg4[%c0_22, %c0_23], %46 {strides = array<i32>} : memref<16x128xf32, #tpu.memory_space<vmem>>, vector<16x128xf32>,
    return
  }
  func.func @transform_0(%arg0: i32) -> (i32, i32) {
    %c0_i32 = arith.constant 0 : i32
    %c0_i32_0 = arith.constant 0 : i32
    %c0_i32_1 = arith.constant 0 : i32
    return %c0_i32, %c0_i32_0 : i32, i32
  }
  func.func @transform_1(%arg0: i32) -> (i32, i32) {
    %c0_i32 = arith.constant 0 : i32
    %c0_i32_0 = arith.constant 0 : i32
    %c0_i32_1 = arith.constant 0 : i32
    return %c0_i32, %c0_i32_0 : i32, i32
  }
  func.func @transform_2(%arg0: i32) -> i32 {
    %c0_i32 = arith.constant 0 : i32
    %c0_i32_0 = arith.constant 0 : i32
    return %c0_i32 : i32
  }
  func.func @transform_3(%arg0: i32) -> (i32, i32) {
    %c0_i32 = arith.constant 0 : i32
    %c0_i32_0 = arith.constant 0 : i32
    %c0_i32_1 = arith.constant 0 : i32
    return %c0_i32, %c0_i32_0 : i32, i32
  }
}

</mosaic_0001>

<llo_original>
// kernel: tpu_custom_call.1
$region0: #{tpu_custom_call.1}
  #allocation0 [shape = 'u32[]', space=smem, size = 0x4, offset = 0x4, fixed_abs, tag = 'smem constant byte address 0x4 - core index']
  #allocation1 [shape = 'u32[72,128]{1,0:T(1,128)}', space=vmem, size = 0x9000, scoped, tag = 'internal scratch']
  #allocation2 [shape = 'f32[1]{0:T(128)S(6)}', space=smem, size = 0x200, scoped, tag = 'scoped memory for tpu_custom_call.1']
  %s0 = inlined_call_operand.hbm [shape: f32[16,128], index: 0, kind: input, shape index: {}]
  %s1 = inlined_call_operand.hbm [shape: f32[3,3], index: 1, kind: input, shape index: {}]
  %s2 = inlined_call_operand.<no memory space> [shape: f32[1], index: 2, kind: input, shape index: {}]
  %s3 = inlined_call_operand.hbm [shape: f32[16,128], index: 3, kind: output, shape index: {}]
  %s4 = sld [smem:[#allocation0]]
  $region30: #{tpu_custom_call.1} parent=0
    _
  %s6 = ssub.s32 1, %s4
  %s7 = scalar_select 0, %s6, %s4
  %8 = sst [smem:[#allocation2]] %s2
  $region1: #{tpu_custom_call.1} parent=0
    #allocation3 [shape = 'u8[8192]{0}', space=vmem, size = 0x2000, scoped, tag = 'input window, operand 0, single buffered']
    #allocation4 [shape = 's32[1]{0}', space=sflag, size = 0x4, scoped, tag = 'scoped memory for tpu_custom_call.1']
    #allocation5 [shape = 's32[1]{0}', space=sflag, size = 0x4, scoped, tag = 'scoped memory for tpu_custom_call.1']
    #allocation6 [shape = 's32[1]{0}', space=sflag, size = 0x4, scoped, tag = 'scoped memory for tpu_custom_call.1']
    #allocation7 [shape = 'u8[2048]{0}', space=smem, size = 0x800, scoped, tag = 'input window, operand 1, single buffered']
    #allocation8 [shape = 'u8[8192]{0}', space=vmem, size = 0x2000, scoped, tag = 'output window, operand 0, single buffered']
    %9 = vsyncpa [#allocation4], 0
    %10 = vsyncpa [#allocation6], 0
    %11 = vsyncpa [#allocation5], 0
    // Predicated region
    $region2: #{tpu_custom_call.1} parent=1 // pred_check
      _
    $region3: #{tpu_custom_call.1} parent=1 // pred_check_branch
      %13 = sbr.rel (0) target = $region5
    $region4: #{tpu_custom_call.1} parent=1 // pred_region
      %15 = vsyncadd [#allocation4], 0
      %s16 = sshll.u32 %s0, 4
      %s17 = int_to_ptr.hbm [resolvable:$true] %s16
      %s18 = sshll.u32 [#allocation3], 4
      %s19 = int_to_ptr.vmem [resolvable:$true] %s18
      %24 = dma.hbm_to_vmem [thread:$0]  %s17, 256, %s19, [#allocation4], 128, 128, 8
    $region5: #{tpu_custom_call.1} parent=1 // pred_fallthru
      _
    // Predicated region
    $region6: #{tpu_custom_call.1} parent=1 // pred_check
      _
    $region7: #{tpu_custom_call.1} parent=1 // pred_check_branch
      %26 = sbr.rel (0) target = $region9
    $region8: #{tpu_custom_call.1} parent=1 // pred_region
      %28 = vsyncadd [#allocation6], 0
      %s30 = sshll.u32 %s1, 4
      %s31 = int_to_ptr.hbm [resolvable:$true] %s30
      %33 = dma.hbm_to_smem %s31, 64, [#allocation7], [#allocation6]
    $region9: #{tpu_custom_call.1} parent=1 // pred_fallthru
      _
    // Predicated region
    $region10: #{tpu_custom_call.1} parent=1 // pred_check
      _
    $region11: #{tpu_custom_call.1} parent=1 // pred_check_branch
      %35 = sbr.rel (0) target = $region13
    $region12: #{tpu_custom_call.1} parent=1 // pred_region
      _
    $region13: #{tpu_custom_call.1} parent=1 // pred_fallthru
      _
    // Predicated region
    $region14: #{tpu_custom_call.1} parent=1 // pred_check
      _
    $region15: #{tpu_custom_call.1} parent=1 // pred_check_branch
      %37 = sbr.rel (0) target = $region17
    $region16: #{tpu_custom_call.1} parent=1 // pred_region
      %39 = dma.done [#allocation4], 256
    $region17: #{tpu_custom_call.1} parent=1 // pred_fallthru
      _
    // Predicated region
    $region18: #{tpu_custom_call.1} parent=1 // pred_check
      _
    $region19: #{tpu_custom_call.1} parent=1 // pred_check_branch
      %41 = sbr.rel (0) target = $region21
    $region20: #{tpu_custom_call.1} parent=1 // pred_region
      %43 = dma.done [#allocation6], 64
    $region21: #{tpu_custom_call.1} parent=1 // pred_fallthru
      _
    %44 = sfence
    %v45 = vld [vmem:[#allocation3] sm:$0xff]
    %v46 = vld [vmem:[#allocation3 + $0x8] sm:$0xff]
    %s47 = sld [smem:[#allocation2]]
    %v48 = vstv %s47
    %s49 = sld [smem:[#allocation7]]
    %v50 = vstv %s49
    %v51 = vmul.f32 %v45, %v50
    %v52 = vmul.f32 %v46, %v50
    %v53 = vadd.f32 %v48, %v51
    %v54 = vadd.f32 %v48, %v52
    %55 = vrot.lane.b32.xlu0 %v45, 127
    %v56 = vpop.permute.xlu0 %55
    %57 = vrot.lane.b32.xlu0 %v46, 127
    %v58 = vpop.permute.xlu0 %57
    %s59 = sld [smem:[#allocation7 + $0x1]]
    %v60 = vstv %s59
    %v61 = vmul.f32 %v56, %v60
    %v62 = vmul.f32 %v58, %v60
    %v63 = vadd.f32 %v53, %v61
    %v64 = vadd.f32 %v54, %v62
    %65 = vrot.lane.b32.xlu0 %v45, 126
    %v66 = vpop.permute.xlu0 %65
    %67 = vrot.lane.b32.xlu0 %v46, 126
    %v68 = vpop.permute.xlu0 %67
    %s69 = sld [smem:[#allocation7 + $0x2]]
    %v70 = vstv %s69
    %v71 = vmul.f32 %v66, %v70
    %v72 = vmul.f32 %v68, %v70
    %v73 = vadd.f32 %v63, %v71
    %v74 = vadd.f32 %v64, %v72
    %v75 = vrot.slane %v45, 1
    %v76 = vrot.slane %v46, 1
    %v77 = vlaneseq
    %v78 = vshrl.u32 %v77, 7
    %vm79 = vcmp.lt.s32.totalorder %v78, 7
    %v80 = vsel %vm79, %v75, %v76
    %v81 = vsel %vm79, %v76, %v75
    %s82 = sld [smem:[#allocation7 + $0x80]]
    %v83 = vstv %s82
    %v84 = vmul.f32 %v80, %v83
    %v85 = vmul.f32 %v81, %v83
    %v86 = vadd.f32 %v73, %v84
    %v87 = vadd.f32 %v74, %v85
    %88 = vrot.lane.b32.xlu0 %v80, 127
    %v89 = vpop.permute.xlu0 %88
    %90 = vrot.lane.b32.xlu0 %v81, 127
    %v91 = vpop.permute.xlu0 %90
    %s92 = sld [smem:[#allocation7 + $0x81]]
    %v93 = vstv %s92
    %v94 = vmul.f32 %v89, %v93
    %v95 = vmul.f32 %v91, %v93
    %v96 = vadd.f32 %v86, %v94
    %v97 = vadd.f32 %v87, %v95
    %98 = vrot.lane.b32.xlu0 %v80, 126
    %v99 = vpop.permute.xlu0 %98
    %100 = vrot.lane.b32.xlu0 %v81, 126
    %v101 = vpop.permute.xlu0 %100
    %s102 = sld [smem:[#allocation7 + $0x82]]
    %v103 = vstv %s102
    %v104 = vmul.f32 %v99, %v103
    %v105 = vmul.f32 %v101, %v103
    %v106 = vadd.f32 %v96, %v104
    %v107 = vadd.f32 %v97, %v105
    %v108 = vrot.slane %v45, 2
    %v109 = vrot.slane %v46, 2
    %vm110 = vcmp.lt.s32.totalorder %v78, 6
    %v111 = vsel %vm110, %v108, %v109
    %v112 = vsel %vm110, %v109, %v108
    %s113 = sld [smem:[#allocation7 + $0x100]]
    %v114 = vstv %s113
    %v115 = vmul.f32 %v111, %v114
    %v116 = vmul.f32 %v112, %v114
    %v117 = vadd.f32 %v106, %v115
    %v118 = vadd.f32 %v107, %v116
    %119 = vrot.lane.b32.xlu0 %v111, 127
    %v120 = vpop.permute.xlu0 %119
    %121 = vrot.lane.b32.xlu0 %v112, 127
    %v122 = vpop.permute.xlu0 %121
    %s123 = sld [smem:[#allocation7 + $0x101]]
    %v124 = vstv %s123
    %v125 = vmul.f32 %v120, %v124
    %v126 = vmul.f32 %v122, %v124
    %v127 = vadd.f32 %v117, %v125
    %v128 = vadd.f32 %v118, %v126
    %129 = vrot.lane.b32.xlu0 %v111, 126
    %v130 = vpop.permute.xlu0 %129
    %131 = vrot.lane.b32.xlu0 %v112, 126
    %v132 = vpop.permute.xlu0 %131
    %s133 = sld [smem:[#allocation7 + $0x102]]
    %v134 = vstv %s133
    %v135 = vmul.f32 %v130, %v134
    %v136 = vmul.f32 %v132, %v134
    %v137 = vadd.f32 %v127, %v135
    %v138 = vadd.f32 %v128, %v136
    %139 = vst [vmem:[#allocation8] sm:$0xff] %v137
    %140 = vst [vmem:[#allocation8 + $0x8] sm:$0xff] %v138
    // Predicated region
    $region22: #{tpu_custom_call.1} parent=1 // pred_check
      _
    $region23: #{tpu_custom_call.1} parent=1 // pred_check_branch
      %142 = sbr.rel (0) target = $region25
    $region24: #{tpu_custom_call.1} parent=1 // pred_region
      %144 = vsyncadd [#allocation5], 0
      %s145 = sshll.u32 [#allocation8], 4
      %s146 = int_to_ptr.vmem [resolvable:$true] %s145
      %s147 = sshll.u32 %s3, 4
      %s148 = int_to_ptr.hbm [resolvable:$true] %s147
      %153 = dma.vmem_to_hbm [thread:$0]  %s146, 256, %s148, [#allocation5], 128, 128, 8
    $region25: #{tpu_custom_call.1} parent=1 // pred_fallthru
      _
    // Predicated region
    $region26: #{tpu_custom_call.1} parent=1 // pred_check
      _
    $region27: #{tpu_custom_call.1} parent=1 // pred_check_branch
      %155 = sbr.rel (0) target = $region29
    $region28: #{tpu_custom_call.1} parent=1 // pred_region
      %157 = dma.done [#allocation5], 256
    $region29: #{tpu_custom_call.1} parent=1 // pred_fallthru
      _
    %158 = vsyncpa [#allocation4], 1
    %159 = vsyncpa [#allocation5], 1
    %160 = vsyncpa [#allocation6], 1

</llo_original>
